<compile_context>
chip_gen: v5e
topology: v5e:2x2
jax: 0.10.0
libtpu: 0.0.40
codegen_flags: <defaults>
</compile_context>

<pallas_src>
import math
import numpy as np
import jax
import jax.numpy as jnp
from jax import lax
from jax.experimental import pallas as pl
from jax.experimental.pallas import tpu as pltpu

# ---------------- config (small, consistent with the module) ----------------
B = 2      # batch
M = 8      # sequence length (<= context_window)
D = 32     # d_model
H = 2      # n_heads
CTX = 16   # context_window

# fused weight-slab column layout
SEC = 5                      # per head: [q, q_shift, k, k_shift, v]
QKV_W = H * SEC * D          # 320
WFF_OFF = QKV_W              # wff at [320, 352)
WGL_OFF = QKV_W + D          # [wg | wl] at [352, 416)
W_TOTAL = WGL_OFF + 2 * D    # 416


def get_rotary_matrix(context_window, embedding_dim):
    """Exact re-implementation of the module-level (buggy) PyTorch helper."""
    R = np.zeros((context_window, embedding_dim, embedding_dim), dtype=np.float32)
    for position in range(context_window):
        for i in range(embedding_dim // 2):
            theta = 10000.0 ** (-2.0 * (i - 1) / embedding_dim)
            m_theta = position * theta
            R[position, 2 * i, 2 * i] = np.cos(theta)
            R[position, 2 * i, 2 * i] = -np.sin(m_theta)   # overwrites cos(theta)
            R[position, 2 * i + 1, 2 * i] = np.sin(m_theta)
            R[position, 2 * i + 1, 2 * i + 1] = np.cos(m_theta)
    return R


# ------------------------------- Pallas kernel -------------------------------
def llama_block_kernel(x_ref, aux_ref, wbig_ref, wo_ref, bias_ref, beta_ref, out_ref):
    x = x_ref[...]                           # (B*M, D) — both batch rows stacked
    scale = aux_ref[0:B * M, :]              # (B*M, D) RMSNorm scale (host-tiled)
    c1 = aux_ref[B * M:B * M + M, :]         # (M, D) diag of R[p]
    c2 = aux_ref[B * M + M:B * M + 2 * M, :] # (M, D) sub-diag of R[p] (0 at odd cols)

    sqrt_numel = math.sqrt(M * D)
    inv_sqrt_d = 1.0 / math.sqrt(D)

    def rmsnorm(v):                          # v: (B*M, D); per-batch Frobenius norm
        blocks = []
        for b in range(B):
            vb = v[b * M:(b + 1) * M, :]
            inv = lax.rsqrt(jnp.sum(vb * vb, keepdims=True)) * sqrt_numel  # (1,1)
            blocks.append(vb * inv)
        return scale * jnp.concatenate(blocks, axis=0)

    # causal mask — built once per call (grid collapsed)
    row = lax.broadcasted_iota(jnp.int32, (M, M), 0)
    col = lax.broadcasted_iota(jnp.int32, (M, M), 1)
    causal = col <= row

    # ---- RMSNorm 1 ----
    x1 = rmsnorm(x)

    # ---- fused Q/K/V(+shift) projection for all heads and both batch rows ----
    qkv = jnp.dot(x1, wbig_ref[:, 0:QKV_W],
                  preferred_element_type=jnp.float32)        # (B*M, H*5*D)

    # ---- per (batch, head) RoPE causal attention ----
    o_rows = []
    for b in range(B):                                       # B=2, tiny static loop
        r0, r1 = b * M, (b + 1) * M
        heads = []
        for h in range(H):                                   # H=2, unrolled
            base = h * SEC * D
            q  = qkv[r0:r1, base + 0 * D:base + 1 * D]
            qs = qkv[r0:r1, base + 1 * D:base + 2 * D]       # column-shifted q
            k  = qkv[r0:r1, base + 2 * D:base + 3 * D]
            ks = qkv[r0:r1, base + 3 * D:base + 4 * D]       # column-shifted k
            v  = qkv[r0:r1, base + 4 * D:base + 5 * D]
            q_rot = c1 * q + c2 * qs
            k_rot = c1 * k + c2 * ks
            s = lax.dot_general(q_rot, k_rot, (((1,), (1,)), ((), ())),
                                preferred_element_type=jnp.float32) * inv_sqrt_d
            s = jnp.where(causal, s, -1e30)
            s = s - jnp.max(s, axis=-1, keepdims=True)
            p = jnp.exp(s)
            p = p * pl.reciprocal(jnp.sum(p, axis=-1, keepdims=True), approx=True)
            heads.append(jnp.dot(p, v, preferred_element_type=jnp.float32))
        o_rows.append(jnp.concatenate(heads, axis=-1))       # (M, H*D)
    o_cat = jnp.concatenate(o_rows, axis=0)                  # (B*M, H*D)

    # fused multi-head output projection
    attn = jnp.dot(o_cat, wo_ref[...],
                   preferred_element_type=jnp.float32) + bias_ref[0:1, :]

    x2 = x1 + attn

    # ---- RMSNorm 2 (same scale parameter) ----
    x3 = rmsnorm(x2)

    # ---- feedforward: Linear -> SwiGLU (gate & linear fused into one matmul) ----
    beta = beta_ref[0]
    y = jnp.dot(x3, wbig_ref[:, WFF_OFF:WFF_OFF + D],
                preferred_element_type=jnp.float32) + bias_ref[1:2, :]
    gl = jnp.dot(y, wbig_ref[:, WGL_OFF:WGL_OFF + 2 * D],
                 preferred_element_type=jnp.float32)
    g = gl[:, 0:D] + bias_ref[2:3, :]
    lin = gl[:, D:2 * D] + bias_ref[3:4, :]
    swish = g * jax.nn.sigmoid(beta * g)

    out_ref[...] = x3 + swish * lin


# ------------------------------- wrapper --------------------------------------
def llama_block(x, kp):
    vmem = pl.BlockSpec(memory_space=pltpu.MemorySpace.VMEM)
    smem = pl.BlockSpec(memory_space=pltpu.MemorySpace.SMEM)
    out2d = pl.pallas_call(
        llama_block_kernel,
        out_shape=jax.ShapeDtypeStruct((B * M, D), jnp.float32),
        in_specs=[vmem, vmem, vmem, vmem, vmem, smem],
        out_specs=vmem,
    )(x.reshape(B * M, D), kp["aux"], kp["wbig"], kp["wo_t"], kp["bias"], kp["beta"])
    return out2d.reshape(B, M, D)


# ---------------------------- pure-JAX reference -------------------------------
def llama_block_ref(x, raw, R):
    scale = raw["scale"]

    def rms(v):
        ff = jnp.sqrt(jnp.sum(v * v, axis=(1, 2))) * ((M * D) ** -0.5)
        return scale[None] * (v / ff[:, None, None])

    x1 = rms(x)
    Rm = jnp.asarray(R[:M])
    mask = np.tril(np.ones((M, M), dtype=bool))
    heads = []
    for h in range(H):
        q = x1 @ raw["wq_t"][h]
        k = x1 @ raw["wk_t"][h]
        v = x1 @ raw["wv_t"][h]
        q_rot = jnp.einsum("bpd,pde->bpe", q, Rm)
        k_rot = jnp.einsum("bpd,pde->bpe", k, Rm)
        s = jnp.einsum("bqd,bkd->bqk", q_rot, k_rot) / np.sqrt(D)
        s = jnp.where(mask[None], s, -jnp.inf)
        a = jax.nn.softmax(s, axis=-1)
        heads.append(jnp.einsum("bqk,bkd->bqd", a, v))
    cat = jnp.concatenate(heads, axis=-1)
    attn = cat @ raw["wo_t"] + raw["bo"]
    x2 = x1 + attn
    x3 = rms(x2)
    y = x3 @ raw["wff_t"] + raw["bff"]
    g = y @ raw["wg_t"] + raw["bg"]
    sw = g * jax.nn.sigmoid(raw["beta"][0] * g)
    lin = y @ raw["wl_t"] + raw["bl"]
    return x3 + sw * lin


# ------------------------------------ main -------------------------------------
if __name__ == "__main__":
    key = jax.random.PRNGKey(0)
    ks = jax.random.split(key, 16)

    def uni(k, shape, fan_in):
        bound = 1.0 / math.sqrt(fan_in)
        return jax.random.uniform(k, shape, jnp.float32, -bound, bound)

    # -------- raw (module-style) parameters; *_t means "transposed": y = x @ W_t
    raw = {
        "wq_t": jnp.transpose(uni(ks[0], (H, D, D), D), (0, 2, 1)),
        "wk_t": jnp.transpose(uni(ks[1], (H, D, D), D), (0, 2, 1)),
        "wv_t": jnp.transpose(uni(ks[2], (H, D, D), D), (0, 2, 1)),
        "wo_t": uni(ks[3], (D, H * D), H * D).T,       # (H*D, D)
        "bo":   uni(ks[4], (1, D), H * D),
        "wff_t": uni(ks[5], (D, D), D).T,
        "bff":  uni(ks[6], (1, D), D),
        "wg_t": uni(ks[7], (D, D), D).T,
        "bg":   uni(ks[8], (1, D), D),
        "wl_t": uni(ks[9], (D, D), D).T,
        "bl":   uni(ks[10], (1, D), D),
        "beta": jnp.ones((1,), jnp.float32),
        "scale": jnp.ones((M, D), jnp.float32),        # RMSNorm scale[:M] (ones init)
    }

    # -------- rotary matrix (exact buggy construction) and its sparse decomposition
    R = get_rotary_matrix(CTX, D)
    c1 = np.stack([np.diagonal(R[p]) for p in range(M)]).astype(np.float32)   # (M, D)
    c2 = np.zeros((M, D), dtype=np.float32)
    even = np.arange(0, D, 2)
    for p in range(M):
        c2[p, even] = R[p, even + 1, even]
    # c2 is zero at odd columns, so the wrapped last column of the shifted
    # projections below never contributes (valid because D is even).

    # -------- pack kernel inputs into a few slabs (host-side, one time)
    def shift_cols(w):       # column j of result = column j+1 of w (wrap is masked by c2)
        return np.roll(np.asarray(w), -1, axis=1)

    head_blocks = []
    for h in range(H):
        wq = np.asarray(raw["wq_t"][h])
        wk = np.asarray(raw["wk_t"][h])
        wv = np.asarray(raw["wv_t"][h])
        head_blocks.append(np.concatenate(
            [wq, shift_cols(wq), wk, shift_cols(wk), wv], axis=1))
    wqkv = np.concatenate(head_blocks, axis=1)                                # (D, 320)
    wbig = np.concatenate([wqkv, np.asarray(raw["wff_t"]),
                           np.asarray(raw["wg_t"]), np.asarray(raw["wl_t"])], axis=1)
    assert wbig.shape == (D, W_TOTAL)

    aux = np.concatenate([np.tile(np.asarray(raw["scale"]), (B, 1)), c1, c2], axis=0)
    bias = np.concatenate([np.asarray(raw["bo"]), np.asarray(raw["bff"]),
                           np.asarray(raw["bg"]), np.asarray(raw["bl"])], axis=0)

    kp = {
        "aux": jnp.asarray(aux),        # (B*M + 2*M, D)
        "wbig": jnp.asarray(wbig),      # (D, 416)
        "wo_t": raw["wo_t"],            # (H*D, D)
        "bias": jnp.asarray(bias),      # (4, D) = [bo; bff; bg; bl]
        "beta": raw["beta"],            # (1,) in SMEM
    }

    x = jax.random.normal(ks[11], (B, M, D), jnp.float32)

    out = jax.block_until_ready(llama_block(x, kp))
    ref = jax.block_until_ready(llama_block_ref(x, raw, R))

    # Tolerance accounts for the intentionally approximate EUP reciprocal in the
    # softmax normalization (perf feedback); any structural error would be >> 2e-3.
    np.testing.assert_allclose(np.asarray(out), np.asarray(ref), rtol=2e-3, atol=2e-3)
    print("KERNEL_OK")
</pallas_src>

<mosaic_0001>
module attributes {stable_mosaic.version = 11 : i64} {
  func.func @llama_block_kernel(%arg0: memref<16x32xf32, #tpu.memory_space<vmem>>, %arg1: memref<32x32xf32, #tpu.memory_space<vmem>>, %arg2: memref<32x416xf32, #tpu.memory_space<vmem>>, %arg3: memref<64x32xf32, #tpu.memory_space<vmem>>, %arg4: memref<4x32xf32, #tpu.memory_space<vmem>>, %arg5: memref<1xf32, #tpu.memory_space<smem>>, %arg6: memref<16x32xf32, #tpu.memory_space<vmem>>) attributes {dimension_semantics = [], scalar_prefetch = 0 : i64, scratch_operands = 0 : i64, tpu.core_type = #tpu.core_type<tc>} {
    %c0 = arith.constant 0 : index
    %c0_0 = arith.constant 0 : index
    %0 = vector.load %arg0[%c0, %c0_0] : memref<16x32xf32, #tpu.memory_space<vmem>>, vector<16x32xf32>
    %c0_1 = arith.constant 0 : index
    %c0_2 = arith.constant 0 : index
    %1 = vector.load %arg1[%c0_1, %c0_2] : memref<32x32xf32, #tpu.memory_space<vmem>>, vector<16x32xf32>
    %c16 = arith.constant 16 : index
    %c0_3 = arith.constant 0 : index
    %2 = vector.load %arg1[%c16, %c0_3] : memref<32x32xf32, #tpu.memory_space<vmem>>, vector<8x32xf32>
    %c24 = arith.constant 24 : index
    %c0_4 = arith.constant 0 : index
    %3 = vector.load %arg1[%c24, %c0_4] : memref<32x32xf32, #tpu.memory_space<vmem>>, vector<8x32xf32>
    %4 = tpu.iota {dimensions = array<i32: 0>} : vector<8x8xi32>
    %5 = tpu.iota {dimensions = array<i32: 1>} : vector<8x8xi32>
    %6 = arith.cmpi sle, %5, %4 : vector<8x8xi32>
    %7 = vector.extract_strided_slice %0 {offsets = [0, 0], sizes = [8, 32], strides = [1, 1]} : vector<16x32xf32> to vector<8x32xf32>
    %8 = arith.mulf %7, %7 : vector<8x32xf32>
    %9 = vector.shape_cast %8 : vector<8x32xf32> to vector<1x8x32xf32>
    %cst = arith.constant dense<0.000000e+00> : vector<1xf32>
    %10 = vector.multi_reduction <add>, %9, %cst [1, 2] : vector<1x8x32xf32> to vector<1xf32>
    %11 = vector.shape_cast %10 : vector<1xf32> to vector<1x1x1xf32>
    %12 = vector.extract %11[0, 0, 0] : f32 from vector<1x1x1xf32>
    %13 = vector.broadcast %12 : f32 to vector<1x1xf32>
    %14 = math.rsqrt %13 : vector<1x1xf32>
    %cst_5 = arith.constant 1.600000e+01 : f32
    %15 = vector.broadcast %cst_5 : f32 to vector<1x1xf32>
    %16 = arith.mulf %14, %15 : vector<1x1xf32>
    %17 = vector.broadcast %16 : vector<1x1xf32> to vector<8x32xf32>
    %18 = arith.mulf %7, %17 : vector<8x32xf32>
    %19 = vector.extract_strided_slice %0 {offsets = [8, 0], sizes = [8, 32], strides = [1, 1]} : vector<16x32xf32> to vector<8x32xf32>
    %20 = arith.mulf %19, %19 : vector<8x32xf32>
    %21 = vector.shape_cast %20 : vector<8x32xf32> to vector<1x8x32xf32>
    %cst_6 = arith.constant dense<0.000000e+00> : vector<1xf32>
    %22 = vector.multi_reduction <add>, %21, %cst_6 [1, 2] : vector<1x8x32xf32> to vector<1xf32>
    %23 = vector.shape_cast %22 : vector<1xf32> to vector<1x1x1xf32>
    %24 = vector.extract %23[0, 0, 0] : f32 from vector<1x1x1xf32>
    %25 = vector.broadcast %24 : f32 to vector<1x1xf32>
    %26 = math.rsqrt %25 : vector<1x1xf32>
    %cst_7 = arith.constant 1.600000e+01 : f32
    %27 = vector.broadcast %cst_7 : f32 to vector<1x1xf32>
    %28 = arith.mulf %26, %27 : vector<1x1xf32>
    %29 = vector.broadcast %28 : vector<1x1xf32> to vector<8x32xf32>
    %30 = arith.mulf %19, %29 : vector<8x32xf32>
    %31 = tpu.concatenate %18, %30 in 0 : vector<8x32xf32>, vector<8x32xf32> -> vector<16x32xf32>
    %32 = arith.mulf %1, %31 : vector<16x32xf32>
    %c0_8 = arith.constant 0 : index
    %c0_9 = arith.constant 0 : index
    %33 = vector.load %arg2[%c0_8, %c0_9] : memref<32x416xf32, #tpu.memory_space<vmem>>, vector<32x320xf32>
    %cst_10 = arith.constant dense<0.000000e+00> : vector<16x320xf32>
    %34 = tpu.matmul %32, %33, %cst_10 {dimension_numbers = #tpu.dot_dimension_numbers<[1], [0], [0], [1], [0, 0, 1, 1], [], []>} : vector<16x32xf32>, vector<32x320xf32>, vector<16x320xf32> -> vector<16x320xf32>
    %35 = vector.extract_strided_slice %34 {offsets = [0, 0], sizes = [8, 32], strides = [1, 1]} : vector<16x320xf32> to vector<8x32xf32>
    %36 = vector.extract_strided_slice %34 {offsets = [0, 32], sizes = [8, 32], strides = [1, 1]} : vector<16x320xf32> to vector<8x32xf32>
    %37 = vector.extract_strided_slice %34 {offsets = [0, 64], sizes = [8, 32], strides = [1, 1]} : vector<16x320xf32> to vector<8x32xf32>
    %38 = vector.extract_strided_slice %34 {offsets = [0, 96], sizes = [8, 32], strides = [1, 1]} : vector<16x320xf32> to vector<8x32xf32>
    %39 = vector.extract_strided_slice %34 {offsets = [0, 128], sizes = [8, 32], strides = [1, 1]} : vector<16x320xf32> to vector<8x32xf32>
    %40 = arith.mulf %2, %35 : vector<8x32xf32>
    %41 = arith.mulf %3, %36 : vector<8x32xf32>
    %42 = arith.addf %40, %41 : vector<8x32xf32>
    %43 = arith.mulf %2, %37 : vector<8x32xf32>
    %44 = arith.mulf %3, %38 : vector<8x32xf32>
    %45 = arith.addf %43, %44 : vector<8x32xf32>
    %cst_11 = arith.constant dense<0.000000e+00> : vector<8x8xf32>
    %46 = tpu.matmul %42, %45, %cst_11 {dimension_numbers = #tpu.dot_dimension_numbers<[1], [1], [0], [0], [0, 0, 1, 0], [], []>} : vector<8x32xf32>, vector<8x32xf32>, vector<8x8xf32> -> vector<8x8xf32>
    %cst_12 = arith.constant 0.176776692 : f32
    %47 = vector.broadcast %cst_12 : f32 to vector<8x8xf32>
    %48 = arith.mulf %46, %47 : vector<8x8xf32>
    %cst_13 = arith.constant -1.000000e+30 : f32
    %49 = vector.broadcast %cst_13 : f32 to vector<8x8xf32>
    %50 = arith.select %6, %48, %49 : vector<8x8xi1>, vector<8x8xf32>
    %cst_14 = arith.constant dense<0xFF800000> : vector<8xf32>
    %51 = vector.multi_reduction <maximumf>, %50, %cst_14 [1] : vector<8x8xf32> to vector<8xf32>
    %52 = vector.shape_cast %51 : vector<8xf32> to vector<8x1xf32>
    %53 = vector.broadcast %52 : vector<8x1xf32> to vector<8x8xf32>
    %54 = arith.subf %50, %53 : vector<8x8xf32>
    %55 = math.exp %54 : vector<8x8xf32>
    %cst_15 = arith.constant dense<0.000000e+00> : vector<8xf32>
    %56 = vector.multi_reduction <add>, %55, %cst_15 [1] : vector<8x8xf32> to vector<8xf32>
    %57 = vector.shape_cast %56 : vector<8xf32> to vector<8x1xf32>
    %58 = tpu.reciprocal %57 {approx = true} : vector<8x1xf32> -> vector<8x1xf32>
    %59 = vector.broadcast %58 : vector<8x1xf32> to vector<8x8xf32>
    %60 = arith.mulf %55, %59 : vector<8x8xf32>
    %cst_16 = arith.constant dense<0.000000e+00> : vector<8x32xf32>
    %61 = tpu.matmul %60, %39, %cst_16 {dimension_numbers = #tpu.dot_dimension_numbers<[1], [0], [0], [1], [0, 0, 1, 1], [], []>} : vector<8x8xf32>, vector<8x32xf32>, vector<8x32xf32> -> vector<8x32xf32>
    %62 = vector.extract_strided_slice %34 {offsets = [0, 160], sizes = [8, 32], strides = [1, 1]} : vector<16x320xf32> to vector<8x32xf32>
    %63 = vector.extract_strided_slice %34 {offsets = [0, 192], sizes = [8, 32], strides = [1, 1]} : vector<16x320xf32> to vector<8x32xf32>
    %64 = vector.extract_strided_slice %34 {offsets = [0, 224], sizes = [8, 32], strides = [1, 1]} : vector<16x320xf32> to vector<8x32xf32>
    %65 = vector.extract_strided_slice %34 {offsets = [0, 256], sizes = [8, 32], strides = [1, 1]} : vector<16x320xf32> to vector<8x32xf32>
    %66 = vector.extract_strided_slice %34 {offsets = [0, 288], sizes = [8, 32], strides = [1, 1]} : vector<16x320xf32> to vector<8x32xf32>
    %67 = arith.mulf %2, %62 : vector<8x32xf32>
    %68 = arith.mulf %3, %63 : vector<8x32xf32>
    %69 = arith.addf %67, %68 : vector<8x32xf32>
    %70 = arith.mulf %2, %64 : vector<8x32xf32>
    %71 = arith.mulf %3, %65 : vector<8x32xf32>
    %72 = arith.addf %70, %71 : vector<8x32xf32>
    %cst_17 = arith.constant dense<0.000000e+00> : vector<8x8xf32>
    %73 = tpu.matmul %69, %72, %cst_17 {dimension_numbers = #tpu.dot_dimension_numbers<[1], [1], [0], [0], [0, 0, 1, 0], [], []>} : vector<8x32xf32>, vector<8x32xf32>, vector<8x8xf32> -> vector<8x8xf32>
    %cst_18 = arith.constant 0.176776692 : f32
    %74 = vector.broadcast %cst_18 : f32 to vector<8x8xf32>
    %75 = arith.mulf %73, %74 : vector<8x8xf32>
    %cst_19 = arith.constant -1.000000e+30 : f32
    %76 = vector.broadcast %cst_19 : f32 to vector<8x8xf32>
    %77 = arith.select %6, %75, %76 : vector<8x8xi1>, vector<8x8xf32>
    %cst_20 = arith.constant dense<0xFF800000> : vector<8xf32>
    %78 = vector.multi_reduction <maximumf>, %77, %cst_20 [1] : vector<8x8xf32> to vector<8xf32>
    %79 = vector.shape_cast %78 : vector<8xf32> to vector<8x1xf32>
    %80 = vector.broadcast %79 : vector<8x1xf32> to vector<8x8xf32>
    %81 = arith.subf %77, %80 : vector<8x8xf32>
    %82 = math.exp %81 : vector<8x8xf32>
    %cst_21 = arith.constant dense<0.000000e+00> : vector<8xf32>
    %83 = vector.multi_reduction <add>, %82, %cst_21 [1] : vector<8x8xf32> to vector<8xf32>
    %84 = vector.shape_cast %83 : vector<8xf32> to vector<8x1xf32>
    %85 = tpu.reciprocal %84 {approx = true} : vector<8x1xf32> -> vector<8x1xf32>
    %86 = vector.broadcast %85 : vector<8x1xf32> to vector<8x8xf32>
    %87 = arith.mulf %82, %86 : vector<8x8xf32>
    %cst_22 = arith.constant dense<0.000000e+00> : vector<8x32xf32>
    %88 = tpu.matmul %87, %66, %cst_22 {dimension_numbers = #tpu.dot_dimension_numbers<[1], [0], [0], [1], [0, 0, 1, 1], [], []>} : vector<8x8xf32>, vector<8x32xf32>, vector<8x32xf32> -> vector<8x32xf32>
    %89 = tpu.concatenate %61, %88 in 1 : vector<8x32xf32>, vector<8x32xf32> -> vector<8x64xf32>
    %90 = vector.extract_strided_slice %34 {offsets = [8, 0], sizes = [8, 32], strides = [1, 1]} : vector<16x320xf32> to vector<8x32xf32>
    %91 = vector.extract_strided_slice %34 {offsets = [8, 32], sizes = [8, 32], strides = [1, 1]} : vector<16x320xf32> to vector<8x32xf32>
    %92 = vector.extract_strided_slice %34 {offsets = [8, 64], sizes = [8, 32], strides = [1, 1]} : vector<16x320xf32> to vector<8x32xf32>
    %93 = vector.extract_strided_slice %34 {offsets = [8, 96], sizes = [8, 32], strides = [1, 1]} : vector<16x320xf32> to vector<8x32xf32>
    %94 = vector.extract_strided_slice %34 {offsets = [8, 128], sizes = [8, 32], strides = [1, 1]} : vector<16x320xf32> to vector<8x32xf32>
    %95 = arith.mulf %2, %90 : vector<8x32xf32>
    %96 = arith.mulf %3, %91 : vector<8x32xf32>
    %97 = arith.addf %95, %96 : vector<8x32xf32>
    %98 = arith.mulf %2, %92 : vector<8x32xf32>
    %99 = arith.mulf %3, %93 : vector<8x32xf32>
    %100 = arith.addf %98, %99 : vector<8x32xf32>
    %cst_23 = arith.constant dense<0.000000e+00> : vector<8x8xf32>
    %101 = tpu.matmul %97, %100, %cst_23 {dimension_numbers = #tpu.dot_dimension_numbers<[1], [1], [0], [0], [0, 0, 1, 0], [], []>} : vector<8x32xf32>, vector<8x32xf32>, vector<8x8xf32> -> vector<8x8xf32>
    %cst_24 = arith.constant 0.176776692 : f32
    %102 = vector.broadcast %cst_24 : f32 to vector<8x8xf32>
    %103 = arith.mulf %101, %102 : vector<8x8xf32>
    %cst_25 = arith.constant -1.000000e+30 : f32
    %104 = vector.broadcast %cst_25 : f32 to vector<8x8xf32>
    %105 = arith.select %6, %103, %104 : vector<8x8xi1>, vector<8x8xf32>
    %cst_26 = arith.constant dense<0xFF800000> : vector<8xf32>
    %106 = vector.multi_reduction <maximumf>, %105, %cst_26 [1] : vector<8x8xf32> to vector<8xf32>
    %107 = vector.shape_cast %106 : vector<8xf32> to vector<8x1xf32>
    %108 = vector.broadcast %107 : vector<8x1xf32> to vector<8x8xf32>
    %109 = arith.subf %105, %108 : vector<8x8xf32>
    %110 = math.exp %109 : vector<8x8xf32>
    %cst_27 = arith.constant dense<0.000000e+00> : vector<8xf32>
    %111 = vector.multi_reduction <add>, %110, %cst_27 [1] : vector<8x8xf32> to vector<8xf32>
    %112 = vector.shape_cast %111 : vector<8xf32> to vector<8x1xf32>
    %113 = tpu.reciprocal %112 {approx = true} : vector<8x1xf32> -> vector<8x1xf32>
    %114 = vector.broadcast %113 : vector<8x1xf32> to vector<8x8xf32>
    %115 = arith.mulf %110, %114 : vector<8x8xf32>
    %cst_28 = arith.constant dense<0.000000e+00> : vector<8x32xf32>
    %116 = tpu.matmul %115, %94, %cst_28 {dimension_numbers = #tpu.dot_dimension_numbers<[1], [0], [0], [1], [0, 0, 1, 1], [], []>} : vector<8x8xf32>, vector<8x32xf32>, vector<8x32xf32> -> vector<8x32xf32>
    %117 = vector.extract_strided_slice %34 {offsets = [8, 160], sizes = [8, 32], strides = [1, 1]} : vector<16x320xf32> to vector<8x32xf32>
    %118 = vector.extract_strided_slice %34 {offsets = [8, 192], sizes = [8, 32], strides = [1, 1]} : vector<16x320xf32> to vector<8x32xf32>
    %119 = vector.extract_strided_slice %34 {offsets = [8, 224], sizes = [8, 32], strides = [1, 1]} : vector<16x320xf32> to vector<8x32xf32>
    %120 = vector.extract_strided_slice %34 {offsets = [8, 256], sizes = [8, 32], strides = [1, 1]} : vector<16x320xf32> to vector<8x32xf32>
    %121 = vector.extract_strided_slice %34 {offsets = [8, 288], sizes = [8, 32], strides = [1, 1]} : vector<16x320xf32> to vector<8x32xf32>
    %122 = arith.mulf %2, %117 : vector<8x32xf32>
    %123 = arith.mulf %3, %118 : vector<8x32xf32>
    %124 = arith.addf %122, %123 : vector<8x32xf32>
    %125 = arith.mulf %2, %119 : vector<8x32xf32>
    %126 = arith.mulf %3, %120 : vector<8x32xf32>
    %127 = arith.addf %125, %126 : vector<8x32xf32>
    %cst_29 = arith.constant dense<0.000000e+00> : vector<8x8xf32>
    %128 = tpu.matmul %124, %127, %cst_29 {dimension_numbers = #tpu.dot_dimension_numbers<[1], [1], [0], [0], [0, 0, 1, 0], [], []>} : vector<8x32xf32>, vector<8x32xf32>, vector<8x8xf32> -> vector<8x8xf32>
    %cst_30 = arith.constant 0.176776692 : f32
    %129 = vector.broadcast %cst_30 : f32 to vector<8x8xf32>
    %130 = arith.mulf %128, %129 : vector<8x8xf32>
    %cst_31 = arith.constant -1.000000e+30 : f32
    %131 = vector.broadcast %cst_31 : f32 to vector<8x8xf32>
    %132 = arith.select %6, %130, %131 : vector<8x8xi1>, vector<8x8xf32>
    %cst_32 = arith.constant dense<0xFF800000> : vector<8xf32>
    %133 = vector.multi_reduction <maximumf>, %132, %cst_32 [1] : vector<8x8xf32> to vector<8xf32>
    %134 = vector.shape_cast %133 : vector<8xf32> to vector<8x1xf32>
    %135 = vector.broadcast %134 : vector<8x1xf32> to vector<8x8xf32>
    %136 = arith.subf %132, %135 : vector<8x8xf32>
    %137 = math.exp %136 : vector<8x8xf32>
    %cst_33 = arith.constant dense<0.000000e+00> : vector<8xf32>
    %138 = vector.multi_reduction <add>, %137, %cst_33 [1] : vector<8x8xf32> to vector<8xf32>
    %139 = vector.shape_cast %138 : vector<8xf32> to vector<8x1xf32>
    %140 = tpu.reciprocal %139 {approx = true} : vector<8x1xf32> -> vector<8x1xf32>
    %141 = vector.broadcast %140 : vector<8x1xf32> to vector<8x8xf32>
    %142 = arith.mulf %137, %141 : vector<8x8xf32>
    %cst_34 = arith.constant dense<0.000000e+00> : vector<8x32xf32>
    %143 = tpu.matmul %142, %121, %cst_34 {dimension_numbers = #tpu.dot_dimension_numbers<[1], [0], [0], [1], [0, 0, 1, 1], [], []>} : vector<8x8xf32>, vector<8x32xf32>, vector<8x32xf32> -> vector<8x32xf32>
    %144 = tpu.concatenate %116, %143 in 1 : vector<8x32xf32>, vector<8x32xf32> -> vector<8x64xf32>
    %145 = tpu.concatenate %89, %144 in 0 : vector<8x64xf32>, vector<8x64xf32> -> vector<16x64xf32>
    %c0_35 = arith.constant 0 : index
    %c0_36 = arith.constant 0 : index
    %146 = vector.load %arg3[%c0_35, %c0_36] : memref<64x32xf32, #tpu.memory_space<vmem>>, vector<64x32xf32>
    %cst_37 = arith.constant dense<0.000000e+00> : vector<16x32xf32>
    %147 = tpu.matmul %145, %146, %cst_37 {dimension_numbers = #tpu.dot_dimension_numbers<[1], [0], [0], [1], [0, 0, 1, 1], [], []>} : vector<16x64xf32>, vector<64x32xf32>, vector<16x32xf32> -> vector<16x32xf32>
    %c0_38 = arith.constant 0 : index
    %c0_39 = arith.constant 0 : index
    %148 = vector.load %arg4[%c0_38, %c0_39] : memref<4x32xf32, #tpu.memory_space<vmem>>, vector<1x32xf32>
    %149 = vector.broadcast %148 : vector<1x32xf32> to vector<16x32xf32>
    %150 = arith.addf %147, %149 : vector<16x32xf32>
    %151 = arith.addf %32, %150 : vector<16x32xf32>
    %152 = vector.extract_strided_slice %151 {offsets = [0, 0], sizes = [8, 32], strides = [1, 1]} : vector<16x32xf32> to vector<8x32xf32>
    %153 = arith.mulf %152, %152 : vector<8x32xf32>
    %154 = vector.shape_cast %153 : vector<8x32xf32> to vector<1x8x32xf32>
    %cst_40 = arith.constant dense<0.000000e+00> : vector<1xf32>
    %155 = vector.multi_reduction <add>, %154, %cst_40 [1, 2] : vector<1x8x32xf32> to vector<1xf32>
    %156 = vector.shape_cast %155 : vector<1xf32> to vector<1x1x1xf32>
    %157 = vector.extract %156[0, 0, 0] : f32 from vector<1x1x1xf32>
    %158 = vector.broadcast %157 : f32 to vector<1x1xf32>
    %159 = math.rsqrt %158 : vector<1x1xf32>
    %cst_41 = arith.constant 1.600000e+01 : f32
    %160 = vector.broadcast %cst_41 : f32 to vector<1x1xf32>
    %161 = arith.mulf %159, %160 : vector<1x1xf32>
    %162 = vector.broadcast %161 : vector<1x1xf32> to vector<8x32xf32>
    %163 = arith.mulf %152, %162 : vector<8x32xf32>
    %164 = vector.extract_strided_slice %151 {offsets = [8, 0], sizes = [8, 32], strides = [1, 1]} : vector<16x32xf32> to vector<8x32xf32>
    %165 = arith.mulf %164, %164 : vector<8x32xf32>
    %166 = vector.shape_cast %165 : vector<8x32xf32> to vector<1x8x32xf32>
    %cst_42 = arith.constant dense<0.000000e+00> : vector<1xf32>
    %167 = vector.multi_reduction <add>, %166, %cst_42 [1, 2] : vector<1x8x32xf32> to vector<1xf32>
    %168 = vector.shape_cast %167 : vector<1xf32> to vector<1x1x1xf32>
    %169 = vector.extract %168[0, 0, 0] : f32 from vector<1x1x1xf32>
    %170 = vector.broadcast %169 : f32 to vector<1x1xf32>
    %171 = math.rsqrt %170 : vector<1x1xf32>
    %cst_43 = arith.constant 1.600000e+01 : f32
    %172 = vector.broadcast %cst_43 : f32 to vector<1x1xf32>
    %173 = arith.mulf %171, %172 : vector<1x1xf32>
    %174 = vector.broadcast %173 : vector<1x1xf32> to vector<8x32xf32>
    %175 = arith.mulf %164, %174 : vector<8x32xf32>
    %176 = tpu.concatenate %163, %175 in 0 : vector<8x32xf32>, vector<8x32xf32> -> vector<16x32xf32>
    %177 = arith.mulf %1, %176 : vector<16x32xf32>
    %c0_44 = arith.constant 0 : index
    %178 = memref.load %arg5[%c0_44] : memref<1xf32, #tpu.memory_space<smem>>
    %c0_45 = arith.constant 0 : index
    %c320 = arith.constant 320 : index
    %179 = vector.load %arg2[%c0_45, %c320] : memref<32x416xf32, #tpu.memory_space<vmem>>, vector<32x32xf32>
    %cst_46 = arith.constant dense<0.000000e+00> : vector<16x32xf32>
    %180 = tpu.matmul %177, %179, %cst_46 {dimension_numbers = #tpu.dot_dimension_numbers<[1], [0], [0], [1], [0, 0, 1, 1], [], []>} : vector<16x32xf32>, vector<32x32xf32>, vector<16x32xf32> -> vector<16x32xf32>
    %c1 = arith.constant 1 : index
    %c0_47 = arith.constant 0 : index
    %181 = vector.load %arg4[%c1, %c0_47] : memref<4x32xf32, #tpu.memory_space<vmem>>, vector<1x32xf32>
    %182 = vector.broadcast %181 : vector<1x32xf32> to vector<16x32xf32>
    %183 = arith.addf %180, %182 : vector<16x32xf32>
    %c0_48 = arith.constant 0 : index
    %c352 = arith.constant 352 : index
    %184 = vector.load %arg2[%c0_48, %c352] : memref<32x416xf32, #tpu.memory_space<vmem>>, vector<32x64xf32>
    %cst_49 = arith.constant dense<0.000000e+00> : vector<16x64xf32>
    %185 = tpu.matmul %183, %184, %cst_49 {dimension_numbers = #tpu.dot_dimension_numbers<[1], [0], [0], [1], [0, 0, 1, 1], [], []>} : vector<16x32xf32>, vector<32x64xf32>, vector<16x64xf32> -> vector<16x64xf32>
    %186 = vector.extract_strided_slice %185 {offsets = [0, 0], sizes = [16, 32], strides = [1, 1]} : vector<16x64xf32> to vector<16x32xf32>
    %c2 = arith.constant 2 : index
    %c0_50 = arith.constant 0 : index
    %187 = vector.load %arg4[%c2, %c0_50] : memref<4x32xf32, #tpu.memory_space<vmem>>, vector<1x32xf32>
    %188 = vector.broadcast %187 : vector<1x32xf32> to vector<16x32xf32>
    %189 = arith.addf %186, %188 : vector<16x32xf32>
    %190 = vector.extract_strided_slice %185 {offsets = [0, 32], sizes = [16, 32], strides = [1, 1]} : vector<16x64xf32> to vector<16x32xf32>
    %c3 = arith.constant 3 : index
    %c0_51 = arith.constant 0 : index
    %191 = vector.load %arg4[%c3, %c0_51] : memref<4x32xf32, #tpu.memory_space<vmem>>, vector<1x32xf32>
    %192 = vector.broadcast %191 : vector<1x32xf32> to vector<16x32xf32>
    %193 = arith.addf %190, %192 : vector<16x32xf32>
    %194 = vector.broadcast %178 : f32 to vector<16x32xf32>
    %195 = arith.mulf %194, %189 : vector<16x32xf32>
    %196 = arith.negf %195 : vector<16x32xf32>
    %197 = math.exp %196 : vector<16x32xf32>
    %cst_52 = arith.constant 1.000000e+00 : f32
    %198 = vector.broadcast %cst_52 : f32 to vector<16x32xf32>
    %199 = arith.addf %198, %197 : vector<16x32xf32>
    %200 = arith.divf %198, %199 : vector<16x32xf32>
    %201 = arith.mulf %189, %200 : vector<16x32xf32>
    %202 = arith.mulf %201, %193 : vector<16x32xf32>
    %203 = arith.addf %177, %202 : vector<16x32xf32>
    %c0_53 = arith.constant 0 : index
    %c0_54 = arith.constant 0 : index
    %204 = vector.load %arg6[%c0_53, %c0_54] : memref<16x32xf32, #tpu.memory_space<vmem>>, vector<16x32xf32>
    tpu.vector_store %arg6[%c0_53, %c0_54], %203 {strides = array<i32>} : memref<16x32xf32, #tpu.memory_space<vmem>>, vector<16x32xf32>,
    return
  }
}

</mosaic_0001>

<llo_original>
// kernel: tpu_custom_call.1
$region0: #{tpu_custom_call.1}
  #allocation0 [shape = 'u32[]', space=smem, size = 0x4, offset = 0x4, fixed_abs, tag = 'smem constant byte address 0x4 - core index']
  #allocation1 [shape = 'u32[72,128]{1,0:T(1,128)}', space=vmem, size = 0x9000, scoped, tag = 'internal scratch']
  #allocation2 [shape = 'f32[1]{0:T(128)S(6)}', space=smem, size = 0x200, scoped, tag = 'scoped memory for tpu_custom_call.1']
  %s0 = inlined_call_operand.vmem [shape: f32[16,32], index: 0, kind: input, shape index: {}]
  %s1 = inlined_call_operand.vmem [shape: f32[32,32], index: 1, kind: input, shape index: {}]
  %s2 = inlined_call_operand.hbm [shape: f32[32,416], index: 2, kind: input, shape index: {}]
  %s3 = inlined_call_operand.vmem [shape: f32[64,32], index: 3, kind: input, shape index: {}]
  %s4 = inlined_call_operand.vmem [shape: f32[4,32], index: 4, kind: input, shape index: {}]
  %s5 = inlined_call_operand.<no memory space> [shape: f32[1], index: 5, kind: input, shape index: {}]
  %s6 = inlined_call_operand.hbm [shape: f32[16,32], index: 6, kind: output, shape index: {}]
  %s7 = sld [smem:[#allocation0]]
  $region38: #{tpu_custom_call.1} parent=0
    _
  %s9 = ssub.s32 1, %s7
  %s10 = scalar_select 0, %s9, %s7
  %11 = sst [smem:[#allocation2]] %s5
  $region1: #{tpu_custom_call.1} parent=0
    #allocation3 [shape = 'u8[65536]{0}', space=vmem, size = 0x10000, scoped, tag = 'input window, operand 2, single buffered']
    #allocation4 [shape = 's32[1]{0}', space=sflag, size = 0x4, scoped, tag = 'scoped memory for tpu_custom_call.1']
    #allocation5 [shape = 's32[1]{0}', space=sflag, size = 0x4, scoped, tag = 'scoped memory for tpu_custom_call.1']
    #allocation6 [shape = 'u8[8192]{0}', space=vmem, size = 0x2000, scoped, tag = 'output window, operand 0, single buffered']
    %12 = vsyncpa [#allocation4], 0
    %13 = vsyncpa [#allocation5], 0
    // Predicated region
    $region2: #{tpu_custom_call.1} parent=1 // pred_check
      _
    $region3: #{tpu_custom_call.1} parent=1 // pred_check_branch
      %15 = sbr.rel (0) target = $region5
    $region4: #{tpu_custom_call.1} parent=1 // pred_region
      _
    $region5: #{tpu_custom_call.1} parent=1 // pred_fallthru
      _
    // Predicated region
    $region6: #{tpu_custom_call.1} parent=1 // pred_check
      _
    $region7: #{tpu_custom_call.1} parent=1 // pred_check_branch
      %17 = sbr.rel (0) target = $region9
    $region8: #{tpu_custom_call.1} parent=1 // pred_region
      _
    $region9: #{tpu_custom_call.1} parent=1 // pred_fallthru
      _
    // Predicated region
    $region10: #{tpu_custom_call.1} parent=1 // pred_check
      _
    $region11: #{tpu_custom_call.1} parent=1 // pred_check_branch
      %19 = sbr.rel (0) target = $region13
    $region12: #{tpu_custom_call.1} parent=1 // pred_region
      %21 = vsyncadd [#allocation4], 0
      %s22 = sshll.u32 %s2, 4
      %s23 = int_to_ptr.hbm [resolvable:$true] %s22
      %s24 = sshll.u32 [#allocation3], 4
      %s25 = int_to_ptr.vmem [resolvable:$true] %s24
      %30 = dma.hbm_to_vmem [thread:$0]  %s23, 2048, %s25, [#allocation4], 512, 512, 32
    $region13: #{tpu_custom_call.1} parent=1 // pred_fallthru
      _
    // Predicated region
    $region14: #{tpu_custom_call.1} parent=1 // pred_check
      _
    $region15: #{tpu_custom_call.1} parent=1 // pred_check_branch
      %32 = sbr.rel (0) target = $region17
    $region16: #{tpu_custom_call.1} parent=1 // pred_region
      _
    $region17: #{tpu_custom_call.1} parent=1 // pred_fallthru
      _
    // Predicated region
    $region18: #{tpu_custom_call.1} parent=1 // pred_check
      _
    $region19: #{tpu_custom_call.1} parent=1 // pred_check_branch
      %34 = sbr.rel (0) target = $region21
    $region20: #{tpu_custom_call.1} parent=1 // pred_region
      _
    $region21: #{tpu_custom_call.1} parent=1 // pred_fallthru
      _
    // Predicated region
    $region22: #{tpu_custom_call.1} parent=1 // pred_check
      _
    $region23: #{tpu_custom_call.1} parent=1 // pred_check_branch
      %36 = sbr.rel (0) target = $region25
    $region24: #{tpu_custom_call.1} parent=1 // pred_region
      _
    $region25: #{tpu_custom_call.1} parent=1 // pred_fallthru
      _
    // Predicated region
    $region26: #{tpu_custom_call.1} parent=1 // pred_check
      _
    $region27: #{tpu_custom_call.1} parent=1 // pred_check_branch
      %38 = sbr.rel (0) target = $region29
    $region28: #{tpu_custom_call.1} parent=1 // pred_region
      %40 = dma.done [#allocation4], 2048
    $region29: #{tpu_custom_call.1} parent=1 // pred_fallthru
      _
    %v41 = vld [vmem:[%s0] sm:$0xff]
    %v42 = vld [vmem:[%s0 + $0x8] sm:$0xff]
    %v43 = vld [vmem:[%s1] sm:$0xff]
    %v44 = vld [vmem:[%s1 + $0x8] sm:$0xff]
    %v45 = vld [vmem:[%s1 + $0x10] sm:$0xff]
    %v46 = vld [vmem:[%s1 + $0x18] sm:$0xff]
    %v47 = vlaneseq
    %v48 = vshrl.u32 %v47, 7
    %v49 = vlaneseq
    %v50 = vand.u32 %v49, 127
    %vm51 = vcmp.le.s32.totalorder %v50, %v48
    %v52 = vmul.f32 %v41, %v41
    %vm53 = vcmask 261120
    %v54 = vsel %vm53, %v52, 0.0
    %55 = vadd.xlane.f32.xlu0 %v54
    %v56 = vpop.xlane.xlu0 %55
    %v57 = vrot.slane %v56, 4
    %v58 = vadd.f32 %v56, %v57
    %v59 = vrot.slane %v58, 2
    %v60 = vadd.f32 %v58, %v59
    %v61 = vrot.slane %v60, 1
    %v62 = vadd.f32 %v60, %v61
    %s63 = vtos %v62
    %v64 = vstv %s63
    %v65 = vrsqrt.pop %v64
    %v66 = vmul.f32 %v65, %v64
    %v67 = vmul.f32 %v66, %v65
    %v68 = vmul.f32 0.5, %v67
    %v69 = vsub.f32 1.5, %v68
    %v70 = vmul.f32 %v65, %v69
    %vm71 = vweird.f32 %v64
    %vm72 = vweird.f32 %v65
    %vm73 = vmor %vm71, %vm72
    %v74 = vsel %vm73, %v65, %v70
    %v75 = vmul.f32 %v74, 16.0
    %v76 = vmul.f32 %v41, %v75
    %v77 = vmul.f32 %v42, %v42
    %v78 = vsel %vm53, %v77, 0.0
    %79 = vadd.xlane.f32.xlu0 %v78
    %v80 = vpop.xlane.xlu0 %79
    %v81 = vrot.slane %v80, 4
    %v82 = vadd.f32 %v80, %v81
    %v83 = vrot.slane %v82, 2
    %v84 = vadd.f32 %v82, %v83
    %v85 = vrot.slane %v84, 1
    %v86 = vadd.f32 %v84, %v85
    %s87 = vtos %v86
    %v88 = vstv %s87
    %v89 = vrsqrt.pop %v88
    %v90 = vmul.f32 %v89, %v88
    %v91 = vmul.f32 %v90, %v89
    %v92 = vmul.f32 0.5, %v91
    %v93 = vsub.f32 1.5, %v92
    %v94 = vmul.f32 %v89, %v93
    %vm95 = vweird.f32 %v88
    %vm96 = vweird.f32 %v89
    %vm97 = vmor %vm95, %vm96
    %v98 = vsel %vm97, %v89, %v94
    %v99 = vmul.f32 %v98, 16.0
    %v100 = vmul.f32 %v42, %v99
    %v101 = vmul.f32 %v43, %v76
    %v102 = vmul.f32 %v44, %v100
    %v103 = vld [vmem:[#allocation3] sm:$0xff]
    %v104 = vld [vmem:[#allocation3 + $0x8] sm:$0xff]
    %v105 = vld [vmem:[#allocation3 + $0x10] sm:$0xff]
    %v106 = vld [vmem:[#allocation3 + $0x20] sm:$0xff]
    %v107 = vld [vmem:[#allocation3 + $0x28] sm:$0xff]
    %v108 = vld [vmem:[#allocation3 + $0x30] sm:$0xff]
    %v109 = vld [vmem:[#allocation3 + $0x40] sm:$0xff]
    %v110 = vld [vmem:[#allocation3 + $0x48] sm:$0xff]
    %v111 = vld [vmem:[#allocation3 + $0x50] sm:$0xff]
    %v112 = vld [vmem:[#allocation3 + $0x60] sm:$0xff]
    %v113 = vld [vmem:[#allocation3 + $0x68] sm:$0xff]
    %v114 = vld [vmem:[#allocation3 + $0x70] sm:$0xff]
    %v116 = vsel %vm53, %v101, 0
    %v119 = vsel %vm53, %v102, 0
    %121 = vmatpush.msra.mxu0 0.0
    %122 = vmatpush.msra.mxu0 0.0
    %123 = vmatpush.msra.mxu0 0.0
    %124 = vmatpush.msra.mxu0 0.0
    %125 = vmatpush.msra.mxu0 0.0
    %126 = vmatpush.msra.mxu0 0.0
    %127 = vmatpush.msra.mxu0 0.0
    %128 = vmatpush.msra.mxu0 0.0
    %129 = vmatpush.msra.mxu0 0.0
    %130 = vmatpush.msra.mxu0 0.0
    %131 = vmatpush.msra.mxu0 0.0
    %132 = vmatpush.msra.mxu0 0.0
    %133 = vmatpush.msra.mxu0 %v112
    %134 = vmatpush.msra.mxu0 %v109
    %135 = vmatpush.msra.mxu0 %v106
    %136 = vmatpush.msra.mxu0 %v103
    %137 = vmatmul.f32.gmra.mxu0 %v116
    %v138 = vpop.f32.mrf.mxu0
    %v139 = vadd.f32 0.0, %v138
    %140 = vmatmul.f32.gmra.mxu0 %v119
    %v141 = vpop.f32.mrf.mxu0
    %v142 = vadd.f32 0.0, %v141
    %143 = vdwg.mxu0
    %144 = vmatpush.msra.mxu0 0.0
    %145 = vmatpush.msra.mxu0 0.0
    %146 = vmatpush.msra.mxu0 0.0
    %147 = vmatpush.msra.mxu0 0.0
    %148 = vmatpush.msra.mxu0 0.0
    %149 = vmatpush.msra.mxu0 0.0
    %150 = vmatpush.msra.mxu0 0.0
    %151 = vmatpush.msra.mxu0 0.0
    %152 = vmatpush.msra.mxu0 0.0
    %153 = vmatpush.msra.mxu0 0.0
    %154 = vmatpush.msra.mxu0 0.0
    %155 = vmatpush.msra.mxu0 0.0
    %156 = vmatpush.msra.mxu0 %v113
    %157 = vmatpush.msra.mxu0 %v110
    %158 = vmatpush.msra.mxu0 %v107
    %159 = vmatpush.msra.mxu0 %v104
    %160 = vmatmul.f32.gmra.mxu0 %v116
    %v161 = vpop.f32.mrf.mxu0
    %v162 = vadd.f32 0.0, %v161
    %163 = vmatmul.f32.gmra.mxu0 %v119
    %v164 = vpop.f32.mrf.mxu0
    %v165 = vadd.f32 0.0, %v164
    %166 = vdwg.mxu0
    %167 = vmatpush.msra.mxu0 0.0
    %168 = vmatpush.msra.mxu0 0.0
    %169 = vmatpush.msra.mxu0 0.0
    %170 = vmatpush.msra.mxu0 0.0
    %171 = vmatpush.msra.mxu0 0.0
    %172 = vmatpush.msra.mxu0 0.0
    %173 = vmatpush.msra.mxu0 0.0
    %174 = vmatpush.msra.mxu0 0.0
    %175 = vmatpush.msra.mxu0 0.0
    %176 = vmatpush.msra.mxu0 0.0
    %177 = vmatpush.msra.mxu0 0.0
    %178 = vmatpush.msra.mxu0 0.0
    %179 = vmatpush.msra.mxu0 %v114
    %180 = vmatpush.msra.mxu0 %v111
    %181 = vmatpush.msra.mxu0 %v108
    %182 = vmatpush.msra.mxu0 %v105
    %183 = vmatmul.f32.gmra.mxu0 %v116
    %v184 = vpop.f32.mrf.mxu0
    %v185 = vadd.f32 0.0, %v184
    %186 = vmatmul.f32.gmra.mxu0 %v119
    %v187 = vpop.f32.mrf.mxu0
    %v188 = vadd.f32 0.0, %v187
    %189 = vdwg.mxu0
    %v190 = vmul.f32 %v45, %v139
    %192 = vrot.lane.b32.xlu0 %v139, 96
    %v193 = vpop.permute.xlu0 %192
    %v195 = vmul.f32 %v46, %v193
    %v196 = vadd.f32 %v190, %v195
    %197 = vrot.lane.b32.xlu0 %v139, 64
    %v198 = vpop.permute.xlu0 %197
    %v200 = vmul.f32 %v45, %v198
    %201 = vrot.lane.b32.xlu0 %v139, 32
    %v202 = vpop.permute.xlu0 %201
    %v204 = vmul.f32 %v46, %v202
    %v205 = vadd.f32 %v200, %v204
    %v207 = vsel %vm53, %v196, 0
    %v210 = vsel %vm53, %v205, 0
    %212 = vmatpush.xpose.msra.mxu0 0.0
    %213 = vmatpush.xpose.msra.mxu0 0.0
    %214 = vmatpush.xpose.msra.mxu0 0.0
    %215 = vmatpush.xpose.msra.mxu0 0.0
    %216 = vmatpush.xpose.msra.mxu0 0.0
    %217 = vmatpush.xpose.msra.mxu0 0.0
    %218 = vmatpush.xpose.msra.mxu0 0.0
    %219 = vmatpush.xpose.msra.mxu0 0.0
    %220 = vmatpush.xpose.msra.mxu0 0.0
    %221 = vmatpush.xpose.msra.mxu0 0.0
    %222 = vmatpush.xpose.msra.mxu0 0.0
    %223 = vmatpush.xpose.msra.mxu0 0.0
    %224 = vmatpush.xpose.msra.mxu0 0.0
    %225 = vmatpush.xpose.msra.mxu0 0.0
    %226 = vmatpush.xpose.msra.mxu0 0.0
    %227 = vmatpush.xpose.msra.mxu0 %v210
    %228 = vmatmul.f32.gmra.mxu0 %v207
    %v229 = vpop.f32.mrf.mxu0
    %v230 = vadd.f32 0.0, %v229
    %231 = vdwg.mxu0
    %v232 = vmul.f32 %v230, 0.17677669
    %v233 = vsel %vm51, %v232, -1e+30
    %vm234 = vcmask 64512
    %v235 = vsel %vm234, %v233, -inf
    %236 = vmax.xlane.f32.xlu0 %v235
    %v237 = vpop.xlane.xlu0 %236
    %v238 = vsub.f32 %v233, %v237
    %v239 = vmul.f32 %v238, 1.442695
    %v240 = vpow.pop %v239
    %v241 = vsel %vm234, %v240, 0.0
    %242 = vadd.xlane.f32.xlu0 %v241
    %v243 = vpop.xlane.xlu0 %242
    %v244 = vrcp.pop %v243
    %v245 = vmul.f32 %v240, %v244
    %v247 = vsel %vm234, %v245, 0
    %249 = vmatpush.msra.mxu0 0.0
    %250 = vmatpush.msra.mxu0 0.0
    %251 = vmatpush.msra.mxu0 0.0
    %252 = vmatpush.msra.mxu0 0.0
    %253 = vmatpush.msra.mxu0 0.0
    %254 = vmatpush.msra.mxu0 0.0
    %255 = vmatpush.msra.mxu0 0.0
    %256 = vmatpush.msra.mxu0 0.0
    %257 = vmatpush.msra.mxu0 0.0
    %258 = vmatpush.msra.mxu0 0.0
    %259 = vmatpush.msra.mxu0 0.0
    %260 = vmatpush.msra.mxu0 0.0
    %261 = vmatpush.msra.mxu0 0.0
    %262 = vmatpush.msra.mxu0 0.0
    %263 = vmatpush.msra.mxu0 0.0
    %264 = vmatpush.msra.mxu0 %v162
    %265 = vmatmul.f32.gmra.mxu0 %v247
    %v266 = vpop.f32.mrf.mxu0
    %v267 = vadd.f32 0.0, %v266
    %268 = vdwg.mxu0
    %270 = vrot.lane.b32.xlu0 %v162, 96
    %v271 = vpop.permute.xlu0 %270
    %v273 = vmul.f32 %v45, %v271
    %274 = vrot.lane.b32.xlu0 %v162, 64
    %v275 = vpop.permute.xlu0 %274
    %v277 = vmul.f32 %v46, %v275
    %v278 = vadd.f32 %v273, %v277
    %279 = vrot.lane.b32.xlu0 %v162, 32
    %v280 = vpop.permute.xlu0 %279
    %v282 = vmul.f32 %v45, %v280
    %v283 = vmul.f32 %v46, %v185
    %v284 = vadd.f32 %v282, %v283
    %v286 = vsel %vm53, %v278, 0
    %v289 = vsel %vm53, %v284, 0
    %291 = vmatpush.xpose.msra.mxu0 0.0
    %292 = vmatpush.xpose.msra.mxu0 0.0
    %293 = vmatpush.xpose.msra.mxu0 0.0
    %294 = vmatpush.xpose.msra.mxu0 0.0
    %295 = vmatpush.xpose.msra.mxu0 0.0
    %296 = vmatpush.xpose.msra.mxu0 0.0
    %297 = vmatpush.xpose.msra.mxu0 0.0
    %298 = vmatpush.xpose.msra.mxu0 0.0
    %299 = vmatpush.xpose.msra.mxu0 0.0
    %300 = vmatpush.xpose.msra.mxu0 0.0
    %301 = vmatpush.xpose.msra.mxu0 0.0
    %302 = vmatpush.xpose.msra.mxu0 0.0
    %303 = vmatpush.xpose.msra.mxu0 0.0
    %304 = vmatpush.xpose.msra.mxu0 0.0
    %305 = vmatpush.xpose.msra.mxu0 0.0
    %306 = vmatpush.xpose.msra.mxu0 %v289
    %307 = vmatmul.f32.gmra.mxu0 %v286
    %v308 = vpop.f32.mrf.mxu0
    %v309 = vadd.f32 0.0, %v308
    %310 = vdwg.mxu0
    %v311 = vmul.f32 %v309, 0.17677669
    %v312 = vsel %vm51, %v311, -1e+30
    %v313 = vsel %vm234, %v312, -inf
    %314 = vmax.xlane.f32.xlu0 %v313
    %v315 = vpop.xlane.xlu0 %314
    %v316 = vsub.f32 %v312, %v315
    %v317 = vmul.f32 %v316, 1.442695
    %v318 = vpow.pop %v317
    %v319 = vsel %vm234, %v318, 0.0
    %320 = vadd.xlane.f32.xlu0 %v319
    %v321 = vpop.xlane.xlu0 %320
    %v322 = vrcp.pop %v321
    %v323 = vmul.f32 %v318, %v322
    %325 = vrot.lane.b32.xlu0 %v185, 96
    %v326 = vpop.permute.xlu0 %325
    %v329 = vsel %vm234, %v323, 0
    %331 = vmatpush.msra.mxu0 0.0
    %332 = vmatpush.msra.mxu0 0.0
    %333 = vmatpush.msra.mxu0 0.0
    %334 = vmatpush.msra.mxu0 0.0
    %335 = vmatpush.msra.mxu0 0.0
    %336 = vmatpush.msra.mxu0 0.0
    %337 = vmatpush.msra.mxu0 0.0
    %338 = vmatpush.msra.mxu0 0.0
    %339 = vmatpush.msra.mxu0 0.0
    %340 = vmatpush.msra.mxu0 0.0
    %341 = vmatpush.msra.mxu0 0.0
    %342 = vmatpush.msra.mxu0 0.0
    %343 = vmatpush.msra.mxu0 0.0
    %344 = vmatpush.msra.mxu0 0.0
    %345 = vmatpush.msra.mxu0 0.0
    %346 = vmatpush.msra.mxu0 %v326
    %347 = vmatmul.f32.gmra.mxu0 %v329
    %v348 = vpop.f32.mrf.mxu0
    %v349 = vadd.f32 0.0, %v348
    %350 = vdwg.mxu0
    %352 = vrot.lane.b32.xlu0 %v349, 32
    %v353 = vpop.permute.xlu0 %352
    %v355 = vsel %vm53, %v267, %v353
    %v356 = vmul.f32 %v45, %v142
    %358 = vrot.lane.b32.xlu0 %v142, 96
    %v359 = vpop.permute.xlu0 %358
    %v361 = vmul.f32 %v46, %v359
    %v362 = vadd.f32 %v356, %v361
    %363 = vrot.lane.b32.xlu0 %v142, 64
    %v364 = vpop.permute.xlu0 %363
    %v366 = vmul.f32 %v45, %v364
    %367 = vrot.lane.b32.xlu0 %v142, 32
    %v368 = vpop.permute.xlu0 %367
    %v370 = vmul.f32 %v46, %v368
    %v371 = vadd.f32 %v366, %v370
    %v373 = vsel %vm53, %v362, 0
    %v376 = vsel %vm53, %v371, 0
    %378 = vmatpush.xpose.msra.mxu0 0.0
    %379 = vmatpush.xpose.msra.mxu0 0.0
    %380 = vmatpush.xpose.msra.mxu0 0.0
    %381 = vmatpush.xpose.msra.mxu0 0.0
    %382 = vmatpush.xpose.msra.mxu0 0.0
    %383 = vmatpush.xpose.msra.mxu0 0.0
    %384 = vmatpush.xpose.msra.mxu0 0.0
    %385 = vmatpush.xpose.msra.mxu0 0.0
    %386 = vmatpush.xpose.msra.mxu0 0.0
    %387 = vmatpush.xpose.msra.mxu0 0.0
    %388 = vmatpush.xpose.msra.mxu0 0.0
    %389 = vmatpush.xpose.msra.mxu0 0.0
    %390 = vmatpush.xpose.msra.mxu0 0.0
    %391 = vmatpush.xpose.msra.mxu0 0.0
    %392 = vmatpush.xpose.msra.mxu0 0.0
    %393 = vmatpush.xpose.msra.mxu0 %v376
    %394 = vmatmul.f32.gmra.mxu0 %v373
    %v395 = vpop.f32.mrf.mxu0
    %v396 = vadd.f32 0.0, %v395
    %397 = vdwg.mxu0
    %v398 = vmul.f32 %v396, 0.17677669
    %v399 = vsel %vm51, %v398, -1e+30
    %v400 = vsel %vm234, %v399, -inf
    %401 = vmax.xlane.f32.xlu0 %v400
    %v402 = vpop.xlane.xlu0 %401
    %v403 = vsub.f32 %v399, %v402
    %v404 = vmul.f32 %v403, 1.442695
    %v405 = vpow.pop %v404
    %v406 = vsel %vm234, %v405, 0.0
    %407 = vadd.xlane.f32.xlu0 %v406
    %v408 = vpop.xlane.xlu0 %407
    %v409 = vrcp.pop %v408
    %v410 = vmul.f32 %v405, %v409
    %v412 = vsel %vm234, %v410, 0
    %414 = vmatpush.msra.mxu0 0.0
    %415 = vmatpush.msra.mxu0 0.0
    %416 = vmatpush.msra.mxu0 0.0
    %417 = vmatpush.msra.mxu0 0.0
    %418 = vmatpush.msra.mxu0 0.0
    %419 = vmatpush.msra.mxu0 0.0
    %420 = vmatpush.msra.mxu0 0.0
    %421 = vmatpush.msra.mxu0 0.0
    %422 = vmatpush.msra.mxu0 0.0
    %423 = vmatpush.msra.mxu0 0.0
    %424 = vmatpush.msra.mxu0 0.0
    %425 = vmatpush.msra.mxu0 0.0
    %426 = vmatpush.msra.mxu0 0.0
    %427 = vmatpush.msra.mxu0 0.0
    %428 = vmatpush.msra.mxu0 0.0
    %429 = vmatpush.msra.mxu0 %v165
    %430 = vmatmul.f32.gmra.mxu0 %v412
    %v431 = vpop.f32.mrf.mxu0
    %v432 = vadd.f32 0.0, %v431
    %433 = vdwg.mxu0
    %435 = vrot.lane.b32.xlu0 %v165, 96
    %v436 = vpop.permute.xlu0 %435
    %v438 = vmul.f32 %v45, %v436
    %439 = vrot.lane.b32.xlu0 %v165, 64
    %v440 = vpop.permute.xlu0 %439
    %v442 = vmul.f32 %v46, %v440
    %v443 = vadd.f32 %v438, %v442
    %444 = vrot.lane.b32.xlu0 %v165, 32
    %v445 = vpop.permute.xlu0 %444
    %v447 = vmul.f32 %v45, %v445
    %v448 = vmul.f32 %v46, %v188
    %v449 = vadd.f32 %v447, %v448
    %v451 = vsel %vm53, %v443, 0
    %v454 = vsel %vm53, %v449, 0
    %456 = vmatpush.xpose.msra.mxu0 0.0
    %457 = vmatpush.xpose.msra.mxu0 0.0
    %458 = vmatpush.xpose.msra.mxu0 0.0
    %459 = vmatpush.xpose.msra.mxu0 0.0
    %460 = vmatpush.xpose.msra.mxu0 0.0
    %461 = vmatpush.xpose.msra.mxu0 0.0
    %462 = vmatpush.xpose.msra.mxu0 0.0
    %463 = vmatpush.xpose.msra.mxu0 0.0
    %464 = vmatpush.xpose.msra.mxu0 0.0
    %465 = vmatpush.xpose.msra.mxu0 0.0
    %466 = vmatpush.xpose.msra.mxu0 0.0
    %467 = vmatpush.xpose.msra.mxu0 0.0
    %468 = vmatpush.xpose.msra.mxu0 0.0
    %469 = vmatpush.xpose.msra.mxu0 0.0
    %470 = vmatpush.xpose.msra.mxu0 0.0
    %471 = vmatpush.xpose.msra.mxu0 %v454
    %472 = vmatmul.f32.gmra.mxu0 %v451
    %v473 = vpop.f32.mrf.mxu0
    %v474 = vadd.f32 0.0, %v473
    %475 = vdwg.mxu0
    %v476 = vmul.f32 %v474, 0.17677669
    %v477 = vsel %vm51, %v476, -1e+30
    %v478 = vsel %vm234, %v477, -inf
    %479 = vmax.xlane.f32.xlu0 %v478
    %v480 = vpop.xlane.xlu0 %479
    %v481 = vsub.f32 %v477, %v480
    %v482 = vmul.f32 %v481, 1.442695
    %v483 = vpow.pop %v482
    %v484 = vsel %vm234, %v483, 0.0
    %485 = vadd.xlane.f32.xlu0 %v484
    %v486 = vpop.xlane.xlu0 %485
    %v487 = vrcp.pop %v486
    %v488 = vmul.f32 %v483, %v487
    %490 = vrot.lane.b32.xlu0 %v188, 96
    %v491 = vpop.permute.xlu0 %490
    %v494 = vsel %vm234, %v488, 0
    %496 = vmatpush.msra.mxu0 0.0
    %497 = vmatpush.msra.mxu0 0.0
    %498 = vmatpush.msra.mxu0 0.0
    %499 = vmatpush.msra.mxu0 0.0
    %500 = vmatpush.msra.mxu0 0.0
    %501 = vmatpush.msra.mxu0 0.0
    %502 = vmatpush.msra.mxu0 0.0
    %503 = vmatpush.msra.mxu0 0.0
    %504 = vmatpush.msra.mxu0 0.0
    %505 = vmatpush.msra.mxu0 0.0
    %506 = vmatpush.msra.mxu0 0.0
    %507 = vmatpush.msra.mxu0 0.0
    %508 = vmatpush.msra.mxu0 0.0
    %509 = vmatpush.msra.mxu0 0.0
    %510 = vmatpush.msra.mxu0 0.0
    %511 = vmatpush.msra.mxu0 %v491
    %512 = vmatmul.f32.gmra.mxu0 %v494
    %v513 = vpop.f32.mrf.mxu0
    %v514 = vadd.f32 0.0, %v513
    %515 = vdwg.mxu0
    %517 = vrot.lane.b32.xlu0 %v514, 32
    %v518 = vpop.permute.xlu0 %517
    %v520 = vsel %vm53, %v432, %v518
    %v521 = vld [vmem:[%s3] sm:$0xff]
    %v522 = vld [vmem:[%s3 + $0x8] sm:$0xff]
    %v523 = vld [vmem:[%s3 + $0x10] sm:$0xff]
    %v524 = vld [vmem:[%s3 + $0x18] sm:$0xff]
    %v525 = vld [vmem:[%s3 + $0x20] sm:$0xff]
    %v526 = vld [vmem:[%s3 + $0x28] sm:$0xff]
    %v527 = vld [vmem:[%s3 + $0x30] sm:$0xff]
    %v528 = vld [vmem:[%s3 + $0x38] sm:$0xff]
    %v529 = vld [vmem:[%s4] sm:$0x1]
    %v530 = vperm.slane %v529, 0
    %vm531 = vcmask 523264
    %v533 = vsel %vm531, %v355, 0
    %v536 = vsel %vm531, %v520, 0
    %538 = vmatpush.msra.mxu0 0.0
    %539 = vmatpush.msra.mxu0 0.0
    %540 = vmatpush.msra.mxu0 0.0
    %541 = vmatpush.msra.mxu0 0.0
    %542 = vmatpush.msra.mxu0 0.0
    %543 = vmatpush.msra.mxu0 0.0
    %544 = vmatpush.msra.mxu0 0.0
    %545 = vmatpush.msra.mxu0 0.0
    %546 = vmatpush.msra.mxu0 %v528
    %547 = vmatpush.msra.mxu0 %v527
    %548 = vmatpush.msra.mxu0 %v526
    %549 = vmatpush.msra.mxu0 %v525
    %550 = vmatpush.msra.mxu0 %v524
    %551 = vmatpush.msra.mxu0 %v523
    %552 = vmatpush.msra.mxu0 %v522
    %553 = vmatpush.msra.mxu0 %v521
    %554 = vmatmul.f32.gmra.mxu0 %v533
    %v555 = vpop.f32.mrf.mxu0
    %v556 = vadd.f32 %v530, %v555
    %557 = vmatmul.f32.gmra.mxu0 %v536
    %v558 = vpop.f32.mrf.mxu0
    %v559 = vadd.f32 %v530, %v558
    %560 = vdwg.mxu0
    %v561 = vadd.f32 %v101, %v556
    %v562 = vadd.f32 %v102, %v559
    %v563 = vmul.f32 %v561, %v561
    %v564 = vsel %vm53, %v563, 0.0
    %565 = vadd.xlane.f32.xlu0 %v564
    %v566 = vpop.xlane.xlu0 %565
    %v567 = vrot.slane %v566, 4
    %v568 = vadd.f32 %v566, %v567
    %v569 = vrot.slane %v568, 2
    %v570 = vadd.f32 %v568, %v569
    %v571 = vrot.slane %v570, 1
    %v572 = vadd.f32 %v570, %v571
    %s573 = vtos %v572
    %v574 = vstv %s573
    %v575 = vrsqrt.pop %v574
    %v576 = vmul.f32 %v575, %v574
    %v577 = vmul.f32 %v576, %v575
    %v578 = vmul.f32 0.5, %v577
    %v579 = vsub.f32 1.5, %v578
    %v580 = vmul.f32 %v575, %v579
    %vm581 = vweird.f32 %v574
    %vm582 = vweird.f32 %v575
    %vm583 = vmor %vm581, %vm582
    %v584 = vsel %vm583, %v575, %v580
    %v585 = vmul.f32 %v584, 16.0
    %v586 = vmul.f32 %v561, %v585
    %v587 = vmul.f32 %v562, %v562
    %v588 = vsel %vm53, %v587, 0.0
    %589 = vadd.xlane.f32.xlu0 %v588
    %v590 = vpop.xlane.xlu0 %589
    %v591 = vrot.slane %v590, 4
    %v592 = vadd.f32 %v590, %v591
    %v593 = vrot.slane %v592, 2
    %v594 = vadd.f32 %v592, %v593
    %v595 = vrot.slane %v594, 1
    %v596 = vadd.f32 %v594, %v595
    %s597 = vtos %v596
    %v598 = vstv %s597
    %v599 = vrsqrt.pop %v598
    %v600 = vmul.f32 %v599, %v598
    %v601 = vmul.f32 %v600, %v599
    %v602 = vmul.f32 0.5, %v601
    %v603 = vsub.f32 1.5, %v602
    %v604 = vmul.f32 %v599, %v603
    %vm605 = vweird.f32 %v598
    %vm606 = vweird.f32 %v599
    %vm607 = vmor %vm605, %vm606
    %v608 = vsel %vm607, %v599, %v604
    %v609 = vmul.f32 %v608, 16.0
    %v610 = vmul.f32 %v562, %v609
    %v611 = vmul.f32 %v43, %v586
    %v612 = vmul.f32 %v44, %v610
    %s613 = sld [smem:[#allocation2]]
    %v614 = vld [vmem:[%s4 + $0x1] sm:$0x1]
    %v615 = vperm.slane %v614, 0
    %620 = vrot.lane.b32.xlu0 %v105, 64
    %v621 = vpop.permute.xlu0 %620
    %622 = vrot.lane.b32.xlu0 %v108, 64
    %v623 = vpop.permute.xlu0 %622
    %624 = vrot.lane.b32.xlu0 %v111, 64
    %v625 = vpop.permute.xlu0 %624
    %626 = vrot.lane.b32.xlu0 %v114, 64
    %v627 = vpop.permute.xlu0 %626
    %v633 = vsel %vm53, %v611, 0
    %v636 = vsel %vm53, %v612, 0
    %638 = vmatpush.msra.mxu0 0.0
    %639 = vmatpush.msra.mxu0 0.0
    %640 = vmatpush.msra.mxu0 0.0
    %641 = vmatpush.msra.mxu0 0.0
    %642 = vmatpush.msra.mxu0 0.0
    %643 = vmatpush.msra.mxu0 0.0
    %644 = vmatpush.msra.mxu0 0.0
    %645 = vmatpush.msra.mxu0 0.0
    %646 = vmatpush.msra.mxu0 0.0
    %647 = vmatpush.msra.mxu0 0.0
    %648 = vmatpush.msra.mxu0 0.0
    %649 = vmatpush.msra.mxu0 0.0
    %650 = vmatpush.msra.mxu0 %v627
    %651 = vmatpush.msra.mxu0 %v625
    %652 = vmatpush.msra.mxu0 %v623
    %653 = vmatpush.msra.mxu0 %v621
    %654 = vmatmul.f32.gmra.mxu0 %v633
    %v655 = vpop.f32.mrf.mxu0
    %v656 = vadd.f32 %v615, %v655
    %657 = vmatmul.f32.gmra.mxu0 %v636
    %v658 = vpop.f32.mrf.mxu0
    %v659 = vadd.f32 %v615, %v658
    %660 = vdwg.mxu0
    %v661 = vld [vmem:[#allocation3 + $0x10] sm:$0xff]
    %v662 = vld [vmem:[#allocation3 + $0x18] sm:$0xff]
    %v663 = vld [vmem:[#allocation3 + $0x30] sm:$0xff]
    %v664 = vld [vmem:[#allocation3 + $0x38] sm:$0xff]
    %v665 = vld [vmem:[#allocation3 + $0x50] sm:$0xff]
    %v666 = vld [vmem:[#allocation3 + $0x58] sm:$0xff]
    %v667 = vld [vmem:[#allocation3 + $0x70] sm:$0xff]
    %v668 = vld [vmem:[#allocation3 + $0x78] sm:$0xff]
    %677 = vrot.lane.b32.xlu0 %v661, 32
    %v678 = vpop.permute.xlu0 %677
    %679 = vrot.lane.b32.xlu0 %v662, 32
    %v680 = vpop.permute.xlu0 %679
    %681 = vrot.lane.b32.xlu0 %v663, 32
    %v682 = vpop.permute.xlu0 %681
    %683 = vrot.lane.b32.xlu0 %v664, 32
    %v684 = vpop.permute.xlu0 %683
    %685 = vrot.lane.b32.xlu0 %v665, 32
    %v686 = vpop.permute.xlu0 %685
    %687 = vrot.lane.b32.xlu0 %v666, 32
    %v688 = vpop.permute.xlu0 %687
    %689 = vrot.lane.b32.xlu0 %v667, 32
    %v690 = vpop.permute.xlu0 %689
    %691 = vrot.lane.b32.xlu0 %v668, 32
    %v692 = vpop.permute.xlu0 %691
    %v693 = vsel %vm53, %v678, %v680
    %v694 = vsel %vm53, %v682, %v684
    %v695 = vsel %vm53, %v686, %v688
    %v696 = vsel %vm53, %v690, %v692
    %v702 = vsel %vm53, %v656, 0
    %v705 = vsel %vm53, %v659, 0
    %707 = vmatpush.msra.mxu0 0.0
    %708 = vmatpush.msra.mxu0 0.0
    %709 = vmatpush.msra.mxu0 0.0
    %710 = vmatpush.msra.mxu0 0.0
    %711 = vmatpush.msra.mxu0 0.0
    %712 = vmatpush.msra.mxu0 0.0
    %713 = vmatpush.msra.mxu0 0.0
    %714 = vmatpush.msra.mxu0 0.0
    %715 = vmatpush.msra.mxu0 0.0
    %716 = vmatpush.msra.mxu0 0.0
    %717 = vmatpush.msra.mxu0 0.0
    %718 = vmatpush.msra.mxu0 0.0
    %719 = vmatpush.msra.mxu0 %v696
    %720 = vmatpush.msra.mxu0 %v695
    %721 = vmatpush.msra.mxu0 %v694
    %722 = vmatpush.msra.mxu0 %v693
    %723 = vmatmul.f32.gmra.mxu0 %v702
    %v724 = vpop.f32.mrf.mxu0
    %v725 = vadd.f32 0.0, %v724
    %726 = vmatmul.f32.gmra.mxu0 %v705
    %v727 = vpop.f32.mrf.mxu0
    %v728 = vadd.f32 0.0, %v727
    %729 = vdwg.mxu0
    %v730 = vld [vmem:[%s4 + $0x2] sm:$0x1]
    %v731 = vperm.slane %v730, 0
    %v732 = vadd.f32 %v725, %v731
    %v733 = vadd.f32 %v728, %v731
    %v734 = vld [vmem:[%s4 + $0x3] sm:$0x1]
    %v735 = vperm.slane %v734, 0
    %737 = vrot.lane.b32.xlu0 %v735, 32
    %v738 = vpop.permute.xlu0 %737
    %v740 = vadd.f32 %v725, %v738
    %v741 = vadd.f32 %v728, %v738
    %v742 = vstv %s613
    %v743 = vmul.f32 %v742, %v732
    %v744 = vmul.f32 %v742, %v733
    %v745 = vxor.u32 %v743, 2147483648
    %v746 = vxor.u32 %v744, 2147483648
    %v747 = vmul.f32 %v745, 1.442695
    %v748 = vpow.pop %v747
    %v749 = vmul.f32 %v746, 1.442695
    %v750 = vpow.pop %v749
    %v751 = vadd.f32 %v748, 1.0
    %v752 = vadd.f32 %v750, 1.0
    %v753 = vrcp.pop %v751
    %v754 = vmul.f32 %v751, %v753
    %v755 = vsub.f32 1.0, %v754
    %v756 = vmul.f32 %v753, %v755
    %v757 = vadd.f32 %v753, %v756
    %vm758 = vweird.f32 %v751
    %vm759 = vweird.f32 %v753
    %vm760 = vmor %vm758, %vm759
    %v761 = vsel %vm760, %v753, %v757
    %v762 = vand.u32 2147483647, %v751
    %vm763 = vcmp.eq.f32.partialorder %v762, 8.507059e+37
    %v764 = vand.u32 %v751, 2147483648
    %v765 = vor.u32 1.1754944e-38, %v764
    %v766 = vsel %vm763, %v765, %v761
    %v767 = vmul.f32 1.0, %v766
    %v768 = vrcp.pop %v752
    %v769 = vmul.f32 %v752, %v768
    %v770 = vsub.f32 1.0, %v769
    %v771 = vmul.f32 %v768, %v770
    %v772 = vadd.f32 %v768, %v771
    %vm773 = vweird.f32 %v752
    %vm774 = vweird.f32 %v768
    %vm775 = vmor %vm773, %vm774
    %v776 = vsel %vm775, %v768, %v772
    %v777 = vand.u32 2147483647, %v752
    %vm778 = vcmp.eq.f32.partialorder %v777, 8.507059e+37
    %v779 = vand.u32 %v752, 2147483648
    %v780 = vor.u32 1.1754944e-38, %v779
    %v781 = vsel %vm778, %v780, %v776
    %v782 = vmul.f32 1.0, %v781
    %v783 = vmul.f32 %v732, %v767
    %v784 = vmul.f32 %v733, %v782
    %787 = vrot.lane.b32.xlu0 %v740, 96
    %v788 = vpop.permute.xlu0 %787
    %789 = vrot.lane.b32.xlu0 %v741, 96
    %v790 = vpop.permute.xlu0 %789
    %v793 = vmul.f32 %v783, %v788
    %v794 = vmul.f32 %v784, %v790
    %v795 = vadd.f32 %v611, %v793
    %v796 = vadd.f32 %v612, %v794
    %797 = vst.msk [vmem:[#allocation6] sm:$0xff] %vm53, %v795
    %798 = vst.msk [vmem:[#allocation6 + $0x8] sm:$0xff] %vm53, %v796
    // Predicated region
    $region30: #{tpu_custom_call.1} parent=1 // pred_check
      _
    $region31: #{tpu_custom_call.1} parent=1 // pred_check_branch
      %800 = sbr.rel (0) target = $region33
    $region32: #{tpu_custom_call.1} parent=1 // pred_region
      %802 = vsyncadd [#allocation5], 0
      %s803 = sshll.u32 [#allocation6], 4
      %s804 = int_to_ptr.vmem [resolvable:$true] %s803
      %s805 = sshll.u32 %s6, 4
      %s806 = int_to_ptr.hbm [resolvable:$true] %s805
      %811 = dma.vmem_to_hbm [thread:$0]  %s804, 256, %s806, [#allocation5], 128, 128, 8
    $region33: #{tpu_custom_call.1} parent=1 // pred_fallthru
      _
    // Predicated region
    $region34: #{tpu_custom_call.1} parent=1 // pred_check
      _
    $region35: #{tpu_custom_call.1} parent=1 // pred_check_branch
      %813 = sbr.rel (0) target = $region37
    $region36: #{tpu_custom_call.1} parent=1 // pred_region
      %815 = dma.done [#allocation5], 256
    $region37: #{tpu_custom_call.1} parent=1 // pred_fallthru
      _
    %816 = vsyncpa [#allocation4], 1
    %817 = vsyncpa [#allocation5], 1

</llo_original>
